<compile_context>
chip_gen: v5e
topology: v5e:2x2
jax: 0.10.0
libtpu: 0.0.40
codegen_flags: <defaults>
</compile_context>

<pallas_src>
import functools

import jax
import jax.numpy as jnp
from jax.experimental import pallas as pl
from jax.experimental.pallas import tpu as pltpu


# ----------------------------------------------------------------------------
# Kernels
# ----------------------------------------------------------------------------

def _ca_fused_kernel(x_ref, w1t_ref, w2t_ref, o_ref, sum_ref, max_ref,
                     *, inv_hw, hw, t_hw):
    """Grid = (N, HW_tiles). Accumulate sum/max over HW, finalize FC+sigmoid.

    x_ref   : (1, C, t_hw)  current batch / HW tile (native dtype)
    w1t_ref : (C, Ch)       fc1 weight, transposed, f32
    w2t_ref : (Ch, C)       fc2 weight, transposed, f32
    o_ref   : (1, 1, C)     sigmoid(avg_out + max_out) for this batch
    sum_ref : (1, C) f32 VMEM scratch (running sum over HW)
    max_ref : (1, C) f32 VMEM scratch (running max over HW)
    """
    j = pl.program_id(1)

    @pl.when(j == 0)
    def _init():
        sum_ref[...] = jnp.zeros_like(sum_ref)
        max_ref[...] = jnp.full_like(max_ref, -jnp.inf)

    x = x_ref[...].astype(jnp.float32)                    # cast right after load
    if hw % t_hw != 0:
        # Masked tail tile: 0 for the sum, -inf for the max.
        pos = jax.lax.broadcasted_iota(jnp.int32, x.shape, 2)
        valid = pos < (hw - j * t_hw)
        xs = jnp.where(valid, x, 0.0)
        xm = jnp.where(valid, x, -jnp.inf)
    else:
        xs = x
        xm = x
    sum_ref[...] = sum_ref[...] + jnp.sum(xs, axis=2)     # (1, C)
    max_ref[...] = jnp.maximum(max_ref[...], jnp.max(xm, axis=2))

    @pl.when(j == pl.num_programs(1) - 1)
    def _finalize():
        avg = sum_ref[...] * inv_hw                       # (1, C)
        mx = max_ref[...]                                 # (1, C)
        pooled = jnp.concatenate([avg, mx], axis=0)       # (2, C): one matmul
        h = jnp.maximum(
            jnp.dot(pooled, w1t_ref[...], preferred_element_type=jnp.float32),
            0.0)
        y = jnp.dot(h, w2t_ref[...], preferred_element_type=jnp.float32)
        scale = jax.nn.sigmoid(y[0:1, :] + y[1:2, :])     # (1, C)
        o_ref[...] = scale[:, None, :].astype(o_ref.dtype)


def _ca_partial_kernel(x_ref, sum_out_ref, max_out_ref, sum_ref, max_ref,
                       *, hw, t_hw, tiles_per_split):
    """Grid = (N, S, T). Each (batch, split) emits a partial (sum, max) over its
    share of HW; combine + FC + sigmoid happen in a tiny JAX epilogue.

    Used only when N == 1 so the HW reduction can be sharded across the two
    v7x TensorCores (the two leading grid axes are "parallel").
    """
    s = pl.program_id(1)
    t = pl.program_id(2)

    @pl.when(t == 0)
    def _init():
        sum_ref[...] = jnp.zeros_like(sum_ref)
        max_ref[...] = jnp.full_like(max_ref, -jnp.inf)

    x = x_ref[...].astype(jnp.float32)                    # (1, C, t_hw)
    # Global HW offset of this tile (the BlockSpec index is clamped, so a tile
    # past the end re-reads valid data; this mask zeroes its contribution).
    off = (s * tiles_per_split + t) * t_hw
    pos = jax.lax.broadcasted_iota(jnp.int32, x.shape, 2)
    valid = pos < (hw - off)
    xs = jnp.where(valid, x, 0.0)
    xm = jnp.where(valid, x, -jnp.inf)
    sum_ref[...] = sum_ref[...] + jnp.sum(xs, axis=2)
    max_ref[...] = jnp.maximum(max_ref[...], jnp.max(xm, axis=2))

    @pl.when(t == pl.num_programs(2) - 1)
    def _finalize():
        sum_out_ref[...] = sum_ref[...][:, None, :]       # (1, 1, C)
        max_out_ref[...] = max_ref[...][:, None, :]


# ----------------------------------------------------------------------------
# Tile / VMEM sizing helpers
# ----------------------------------------------------------------------------

def _vmem_budget():
    """Generation-aware budget: (max single-buffer x-tile bytes, vmem limit)."""
    cap = 64 * 1024 * 1024                                # conservative (v7x)
    try:
        info = pltpu.get_tpu_info()
        cap = int(getattr(info, "vmem_capacity_bytes", cap))
    except Exception:
        pass
    # Double-buffered x tile uses 2x this; leave the rest for weights/output/
    # compiler scratch.  128 MiB (v5e/v6e) -> 32 MiB tile, 96 MiB limit;
    # 64 MiB (v7x) -> 16 MiB tile, 48 MiB limit.
    max_block_bytes = cap // 4
    vmem_limit = min((cap * 3) // 4, 96 * 1024 * 1024)
    return max_block_bytes, vmem_limit


def _pick_hw_tile(hw, c, itemsize, max_block_bytes):
    """Prefer one contiguous full-HW block; else the largest 128-multiple that
    fits the budget (tail tile handled by in-kernel masking)."""
    t = (max_block_bytes // max(c * itemsize, 1)) // 128 * 128
    t = max(t, 128)
    if t >= hw:
        return hw                                         # one full-extent block
    return t


# ----------------------------------------------------------------------------
# Wrapper
# ----------------------------------------------------------------------------

def channel_attention(x, fc1_w, fc2_w, *, hw_tile=None, reduce_splits=None):
    """Pallas ChannelAttention forward.

    x     : (N, C, H, W)  float32 or bfloat16 (streamed in its native dtype)
    fc1_w : (C // ratio, C, 1, 1)   (Conv2d 1x1, bias=False)
    fc2_w : (C, C // ratio, 1, 1)   (Conv2d 1x1, bias=False)
    returns (N, C, 1, 1) sigmoid attention map, dtype of x (matches PyTorch).
    """
    N, C, H, W = x.shape
    HW = H * W
    Ch = fc1_w.shape[0]
    assert fc2_w.shape[0] == C and fc1_w.shape[1] == C and fc2_w.shape[1] == Ch

    xf = x.reshape(N, C, HW)                              # free reshape
    w1t = fc1_w.reshape(Ch, C).T.astype(jnp.float32)      # (C, Ch)
    w2t = fc2_w.reshape(C, Ch).T.astype(jnp.float32)      # (Ch, C)

    itemsize = jnp.dtype(x.dtype).itemsize
    max_block_bytes, vmem_limit = _vmem_budget()
    if hw_tile is not None:
        t_hw = max(128, (int(hw_tile) // 128) * 128)
        t_hw = HW if t_hw >= HW else t_hw
    else:
        t_hw = _pick_hw_tile(HW, C, itemsize, max_block_bytes)
    n_tiles = pl.cdiv(HW, t_hw)

    # 2-way HW-reduction split (v7x megacore) only makes sense for N == 1.
    if reduce_splits is None:
        want_split = (N == 1 and HW >= 256)
    else:
        want_split = (reduce_splits > 1 and N == 1)
    if want_split and n_tiles == 1 and HW >= 256:
        # Halve the tile (lane-aligned) so the reduction has 2 tiles to split.
        t_hw = min(t_hw, (((HW + 1) // 2 + 127) // 128) * 128)
        n_tiles = pl.cdiv(HW, t_hw)
    n_splits = 2 if (want_split and n_tiles >= 2) else 1

    if n_splits == 1:
        # ---------------- fully fused path ----------------
        out = pl.pallas_call(
            functools.partial(_ca_fused_kernel,
                              inv_hw=1.0 / HW, hw=HW, t_hw=t_hw),
            out_shape=jax.ShapeDtypeStruct((N, 1, C), x.dtype),
            grid=(N, n_tiles),
            in_specs=[
                pl.BlockSpec((1, C, t_hw), lambda i, j: (i, 0, j)),
                pl.BlockSpec((C, Ch), lambda i, j: (0, 0)),   # resident weights
                pl.BlockSpec((Ch, C), lambda i, j: (0, 0)),
            ],
            out_specs=pl.BlockSpec((1, 1, C), lambda i, j: (i, 0, 0)),
            scratch_shapes=[pltpu.VMEM((1, C), jnp.float32),
                            pltpu.VMEM((1, C), jnp.float32)],
            compiler_params=pltpu.CompilerParams(
                dimension_semantics=("parallel", "arbitrary"),
                vmem_limit_bytes=vmem_limit),
        )(xf, w1t, w2t)
        return out.reshape(N, C, 1, 1)

    # ---------------- split-reduction path (N == 1) ----------------
    S = n_splits
    T = pl.cdiv(n_tiles, S)
    n_blocks = n_tiles

    sums, maxes = pl.pallas_call(
        functools.partial(_ca_partial_kernel,
                          hw=HW, t_hw=t_hw, tiles_per_split=T),
        out_shape=(jax.ShapeDtypeStruct((S, N, C), jnp.float32),
                   jax.ShapeDtypeStruct((S, N, C), jnp.float32)),
        grid=(N, S, T),
        in_specs=[pl.BlockSpec(
            (1, C, t_hw),
            lambda i, s, t: (i, 0, jnp.minimum(s * T + t, n_blocks - 1)))],
        out_specs=(pl.BlockSpec((1, 1, C), lambda i, s, t: (s, i, 0)),
                   pl.BlockSpec((1, 1, C), lambda i, s, t: (s, i, 0))),
        scratch_shapes=[pltpu.VMEM((1, C), jnp.float32),
                        pltpu.VMEM((1, C), jnp.float32)],
        compiler_params=pltpu.CompilerParams(
            dimension_semantics=("parallel", "parallel", "arbitrary"),
            vmem_limit_bytes=vmem_limit),
    )(xf)

    # Tiny epilogue on (N, C): combine splits, FC (stacked avg/max), sigmoid.
    avg = jnp.sum(sums, axis=0) * (1.0 / HW)              # (N, C)
    mx = jnp.max(maxes, axis=0)                           # (N, C)
    pooled = jnp.concatenate([avg, mx], axis=0)           # (2N, C)
    h = jnp.maximum(pooled @ w1t, 0.0)
    y = h @ w2t
    scale = jax.nn.sigmoid(y[:N] + y[N:])                 # (N, C)
    return scale.astype(x.dtype).reshape(N, C, 1, 1)


# ----------------------------------------------------------------------------
# Pure-JAX reference (for correctness check)
# ----------------------------------------------------------------------------

def _ref_conv1x1(x, w):
    return jax.lax.conv_general_dilated(
        x, w, (1, 1), "VALID", dimension_numbers=("NCHW", "OIHW", "NCHW"))


def _ref_channel_attention(x, fc1_w, fc2_w):
    avg = jnp.mean(x, axis=(2, 3), keepdims=True)
    mx = jnp.max(x, axis=(2, 3), keepdims=True)

    def fc(v):
        return _ref_conv1x1(jax.nn.relu(_ref_conv1x1(v, fc1_w)), fc2_w)

    return jax.nn.sigmoid(fc(avg) + fc(mx))


# ----------------------------------------------------------------------------
# Main
# ----------------------------------------------------------------------------

if __name__ == "__main__":
    key = jax.random.PRNGKey(0)
    ratio = 16

    def make_inputs(kx, kw1, kw2, n, c, h, w, dtype):
        ch = max(c // ratio, 1)
        x = jax.random.normal(kx, (n, c, h, w), jnp.float32).astype(dtype)
        w1 = 0.1 * jax.random.normal(kw1, (ch, c, 1, 1), jnp.float32)
        w2 = 0.1 * jax.random.normal(kw2, (c, ch, 1, 1), jnp.float32)
        return x, w1, w2

    keys = jax.random.split(key, 9)

    # 1) Baseline fused path: f32, HW multiple of 128, full-HW tile.
    x, w1, w2 = make_inputs(keys[0], keys[1], keys[2], 2, 32, 16, 16, jnp.float32)
    out = jax.block_until_ready(channel_attention(x, w1, w2))
    ref = _ref_channel_attention(x, w1, w2)
    assert out.shape == (2, 32, 1, 1), out.shape
    assert jnp.allclose(out, ref, rtol=1e-4, atol=1e-4), float(
        jnp.max(jnp.abs(out - ref)))

    # 1b) Fused path, multi-tile reduction (forced 128-wide HW tiles).
    out = jax.block_until_ready(channel_attention(x, w1, w2, hw_tile=128))
    assert jnp.allclose(out, ref, rtol=1e-4, atol=1e-4)

    # 2) N=1, HW not a multiple of 128, small tiles -> masked tail + 2-way split.
    x, w1, w2 = make_inputs(keys[3], keys[4], keys[5], 1, 32, 24, 24, jnp.float32)
    out = jax.block_until_ready(channel_attention(x, w1, w2, hw_tile=128))
    ref = _ref_channel_attention(x, w1, w2)
    assert out.shape == (1, 32, 1, 1), out.shape
    assert jnp.allclose(out, ref, rtol=1e-4, atol=1e-4), float(
        jnp.max(jnp.abs(out - ref)))

    # 3) bf16 activations streamed natively (halved HBM traffic).
    x, w1, w2 = make_inputs(keys[6], keys[7], keys[8], 2, 64, 16, 16, jnp.bfloat16)
    out = jax.block_until_ready(channel_attention(x, w1, w2))
    ref = _ref_channel_attention(x.astype(jnp.float32), w1, w2)
    assert out.dtype == jnp.bfloat16
    assert jnp.allclose(out.astype(jnp.float32), ref, atol=1e-2), float(
        jnp.max(jnp.abs(out.astype(jnp.float32) - ref)))

    print("KERNEL_OK")
</pallas_src>

<mosaic_0001>
module attributes {stable_mosaic.version = 11 : i64} {
  func.func @_ca_fused_kernel(%arg0: i32, %arg1: i32, %arg2: memref<1x32x256xf32, #tpu.memory_space<vmem>>, %arg3: memref<32x2xf32, #tpu.memory_space<vmem>>, %arg4: memref<2x32xf32, #tpu.memory_space<vmem>>, %arg5: memref<1x1x32xf32, #tpu.memory_space<vmem>>, %arg6: memref<1x32xf32, #tpu.memory_space<vmem>>, %arg7: memref<1x32xf32, #tpu.memory_space<vmem>>) attributes {dimension_semantics = [#tpu.dimension_semantics<parallel>, #tpu.dimension_semantics<arbitrary>], iteration_bounds = array<i64: 2, 1>, scalar_prefetch = 0 : i64, scratch_operands = 2 : i64, tpu.core_type = #tpu.core_type<tc>, window_params = [{transform_indices = @transform_0, window_bounds = array<i64: 1, 32, 256>}, {pipeline_mode = #tpu.pipeline_mode<synchronous>, transform_indices = @transform_1, window_bounds = array<i64: 32, 2>}, {pipeline_mode = #tpu.pipeline_mode<synchronous>, transform_indices = @transform_2, window_bounds = array<i64: 2, 32>}, {transform_indices = @transform_3, window_bounds = array<i64: 1, 1, 32>}]} {
    %c0_i32 = arith.constant 0 : i32
    %0 = arith.cmpi eq, %arg1, %c0_i32 : i32
    %1 = arith.extui %0 : i1 to i32
    %c0_i32_0 = arith.constant 0 : i32
    %2 = arith.cmpi ne, %1, %c0_i32_0 : i32
    scf.if %2 {
      %cst_14 = arith.constant 0.000000e+00 : f32
      %15 = vector.broadcast %cst_14 : f32 to vector<1x32xf32>
      %c0_15 = arith.constant 0 : index
      %c0_16 = arith.constant 0 : index
      %16 = vector.load %arg6[%c0_15, %c0_16] : memref<1x32xf32, #tpu.memory_space<vmem>>, vector<1x32xf32>
      tpu.vector_store %arg6[%c0_15, %c0_16], %15 {strides = array<i32>} : memref<1x32xf32, #tpu.memory_space<vmem>>, vector<1x32xf32>,
      %cst_17 = arith.constant 0xFF800000 : f32
      %17 = vector.broadcast %cst_17 : f32 to vector<1x32xf32>
      %c0_18 = arith.constant 0 : index
      %c0_19 = arith.constant 0 : index
      %18 = vector.load %arg7[%c0_18, %c0_19] : memref<1x32xf32, #tpu.memory_space<vmem>>, vector<1x32xf32>
      tpu.vector_store %arg7[%c0_18, %c0_19], %17 {strides = array<i32>} : memref<1x32xf32, #tpu.memory_space<vmem>>, vector<1x32xf32>,
    } else {
    }
    %c0 = arith.constant 0 : index
    %c0_1 = arith.constant 0 : index
    %c0_2 = arith.constant 0 : index
    %3 = vector.load %arg2[%c0, %c0_1, %c0_2] : memref<1x32x256xf32, #tpu.memory_space<vmem>>, vector<1x32x256xf32>
    %c0_3 = arith.constant 0 : index
    %c0_4 = arith.constant 0 : index
    %4 = vector.load %arg6[%c0_3, %c0_4] : memref<1x32xf32, #tpu.memory_space<vmem>>, vector<1x32xf32>
    %cst = arith.constant dense<0.000000e+00> : vector<1x32xf32>
    %5 = vector.multi_reduction <add>, %3, %cst [2] : vector<1x32x256xf32> to vector<1x32xf32>
    %6 = arith.addf %4, %5 : vector<1x32xf32>
    %c0_5 = arith.constant 0 : index
    %c0_6 = arith.constant 0 : index
    %7 = vector.load %arg6[%c0_5, %c0_6] : memref<1x32xf32, #tpu.memory_space<vmem>>, vector<1x32xf32>
    tpu.vector_store %arg6[%c0_5, %c0_6], %6 {strides = array<i32>} : memref<1x32xf32, #tpu.memory_space<vmem>>, vector<1x32xf32>,
    %c0_7 = arith.constant 0 : index
    %c0_8 = arith.constant 0 : index
    %8 = vector.load %arg7[%c0_7, %c0_8] : memref<1x32xf32, #tpu.memory_space<vmem>>, vector<1x32xf32>
    %cst_9 = arith.constant dense<0xFF800000> : vector<1x32xf32>
    %9 = vector.multi_reduction <maximumf>, %3, %cst_9 [2] : vector<1x32x256xf32> to vector<1x32xf32>
    %10 = arith.maximumf %8, %9 : vector<1x32xf32>
    %c0_10 = arith.constant 0 : index
    %c0_11 = arith.constant 0 : index
    %11 = vector.load %arg7[%c0_10, %c0_11] : memref<1x32xf32, #tpu.memory_space<vmem>>, vector<1x32xf32>
    tpu.vector_store %arg7[%c0_10, %c0_11], %10 {strides = array<i32>} : memref<1x32xf32, #tpu.memory_space<vmem>>, vector<1x32xf32>,
    %c0_i32_12 = arith.constant 0 : i32
    %12 = arith.cmpi eq, %arg1, %c0_i32_12 : i32
    %13 = arith.extui %12 : i1 to i32
    %c0_i32_13 = arith.constant 0 : i32
    %14 = arith.cmpi ne, %13, %c0_i32_13 : i32
    scf.if %14 {
      %c0_14 = arith.constant 0 : index
      %c0_15 = arith.constant 0 : index
      %15 = vector.load %arg6[%c0_14, %c0_15] : memref<1x32xf32, #tpu.memory_space<vmem>>, vector<1x32xf32>
      %cst_16 = arith.constant 3.906250e-03 : f32
      %16 = vector.broadcast %cst_16 : f32 to vector<1x32xf32>
      %17 = arith.mulf %15, %16 : vector<1x32xf32>
      %c0_17 = arith.constant 0 : index
      %c0_18 = arith.constant 0 : index
      %18 = vector.load %arg7[%c0_17, %c0_18] : memref<1x32xf32, #tpu.memory_space<vmem>>, vector<1x32xf32>
      %19 = tpu.concatenate %17, %18 in 0 : vector<1x32xf32>, vector<1x32xf32> -> vector<2x32xf32>
      %c0_19 = arith.constant 0 : index
      %c0_20 = arith.constant 0 : index
      %20 = vector.load %arg3[%c0_19, %c0_20] : memref<32x2xf32, #tpu.memory_space<vmem>>, vector<32x2xf32>
      %cst_21 = arith.constant dense<0.000000e+00> : vector<2x2xf32>
      %21 = tpu.matmul %19, %20, %cst_21 {dimension_numbers = #tpu.dot_dimension_numbers<[1], [0], [0], [1], [0, 0, 1, 1], [], []>} : vector<2x32xf32>, vector<32x2xf32>, vector<2x2xf32> -> vector<2x2xf32>
      %cst_22 = arith.constant 0.000000e+00 : f32
      %22 = vector.broadcast %cst_22 : f32 to vector<2x2xf32>
      %23 = arith.maximumf %21, %22 : vector<2x2xf32>
      %c0_23 = arith.constant 0 : index
      %c0_24 = arith.constant 0 : index
      %24 = vector.load %arg4[%c0_23, %c0_24] : memref<2x32xf32, #tpu.memory_space<vmem>>, vector<2x32xf32>
      %cst_25 = arith.constant dense<0.000000e+00> : vector<2x32xf32>
      %25 = tpu.matmul %23, %24, %cst_25 {dimension_numbers = #tpu.dot_dimension_numbers<[1], [0], [0], [1], [0, 0, 1, 1], [], []>} : vector<2x2xf32>, vector<2x32xf32>, vector<2x32xf32> -> vector<2x32xf32>
      %26 = vector.extract_strided_slice %25 {offsets = [0, 0], sizes = [1, 32], strides = [1, 1]} : vector<2x32xf32> to vector<1x32xf32>
      %27 = vector.extract_strided_slice %25 {offsets = [1, 0], sizes = [1, 32], strides = [1, 1]} : vector<2x32xf32> to vector<1x32xf32>
      %28 = arith.addf %26, %27 : vector<1x32xf32>
      %29 = arith.negf %28 : vector<1x32xf32>
      %30 = math.exp %29 : vector<1x32xf32>
      %cst_26 = arith.constant 1.000000e+00 : f32
      %31 = vector.broadcast %cst_26 : f32 to vector<1x32xf32>
      %32 = arith.addf %31, %30 : vector<1x32xf32>
      %33 = arith.divf %31, %32 : vector<1x32xf32>
      %34 = vector.shape_cast %33 : vector<1x32xf32> to vector<1x1x32xf32>
      %c0_27 = arith.constant 0 : index
      %c0_28 = arith.constant 0 : index
      %c0_29 = arith.constant 0 : index
      %35 = vector.load %arg5[%c0_27, %c0_28, %c0_29] : memref<1x1x32xf32, #tpu.memory_space<vmem>>, vector<1x1x32xf32>
      tpu.vector_store %arg5[%c0_27, %c0_28, %c0_29], %34 {strides = array<i32>} : memref<1x1x32xf32, #tpu.memory_space<vmem>>, vector<1x1x32xf32>,
    } else {
    }
    return
  }
  func.func @transform_0(%arg0: i32, %arg1: i32) -> (i32, i32, i32) {
    %c0_i32 = arith.constant 0 : i32
    %c0_i32_0 = arith.constant 0 : i32
    return %arg0, %c0_i32, %arg1 : i32, i32, i32
  }
  func.func @transform_1(%arg0: i32, %arg1: i32) -> (i32, i32) {
    %c0_i32 = arith.constant 0 : i32
    %c0_i32_0 = arith.constant 0 : i32
    %c0_i32_1 = arith.constant 0 : i32
    return %c0_i32, %c0_i32_0 : i32, i32
  }
  func.func @transform_2(%arg0: i32, %arg1: i32) -> (i32, i32) {
    %c0_i32 = arith.constant 0 : i32
    %c0_i32_0 = arith.constant 0 : i32
    %c0_i32_1 = arith.constant 0 : i32
    return %c0_i32, %c0_i32_0 : i32, i32
  }
  func.func @transform_3(%arg0: i32, %arg1: i32) -> (i32, i32, i32) {
    %c0_i32 = arith.constant 0 : i32
    %c0_i32_0 = arith.constant 0 : i32
    %c0_i32_1 = arith.constant 0 : i32
    return %arg0, %c0_i32, %c0_i32_0 : i32, i32, i32
  }
}

</mosaic_0001>

<llo_original>
// kernel: tpu_custom_call.1
$region0: #{tpu_custom_call.1}
  #allocation0 [shape = 'u32[]', space=smem, size = 0x4, offset = 0x4, fixed_abs, tag = 'smem constant byte address 0x4 - core index']
  #allocation1 [shape = 'u32[72,128]{1,0:T(1,128)}', space=vmem, size = 0x9000, scoped, tag = 'internal scratch']
  #allocation2 [shape = 'f32[1,32]{1,0:T(1,128)}', space=vmem, size = 0x200, scoped, tag = 'scratch operand']
  #allocation3 [shape = 'f32[1,32]{1,0:T(1,128)}', space=vmem, size = 0x200, scoped, tag = 'scratch operand']
  %s0 = inlined_call_operand.hbm [shape: f32[2,32,256], index: 0, kind: input, shape index: {}]
  %s1 = inlined_call_operand.vmem [shape: f32[32,2], index: 1, kind: input, shape index: {}]
  %s2 = inlined_call_operand.vmem [shape: f32[2,32], index: 2, kind: input, shape index: {}]
  %s3 = inlined_call_operand.hbm [shape: f32[2,1,32], index: 3, kind: output, shape index: {}]
  %s4 = sld [smem:[#allocation0]]
  $region57: #{tpu_custom_call.1} parent=0
    _
  %s6 = ssub.s32 1, %s4
  %s7 = scalar_select 0, %s6, %s4
  $region1: #{tpu_custom_call.1} parent=0
    #allocation4 [shape = 'u8[65536]{0}', space=vmem, size = 0x10000, scoped, tag = 'input window, operand 0']
    #allocation5 [shape = 's32[2]{0}', space=sflag, size = 0x8, scoped, tag = 'scoped memory for tpu_custom_call.1']
    #allocation6 [shape = 's32[2]{0}', space=sflag, size = 0x8, scoped, tag = 'scoped memory for tpu_custom_call.1']
    #allocation7 [shape = 'u8[1024]{0}', space=vmem, size = 0x400, scoped, tag = 'output window, operand 0']
    %8 = vsyncpa [#allocation5], 0
    %s9 = scalar_lea.sflag [#allocation5], 1
    %10 = vsyncpa %s9, 0
    %11 = vsyncpa [#allocation6], 0
    %s12 = scalar_lea.sflag [#allocation6], 1
    %13 = vsyncpa %s12, 0
    loop: start=0, step=1, limit=4
    $region2: #{tpu_custom_call.1} parent=1 // loop_pre_header
      _
    $region3: #{tpu_custom_call.1} parent=1 // loop_header
      %s15 = sphi 0, %s19
      %p16 = scmp.ge.s32.totalorder %s15, 4
      %s22 = sphi 0, %s34
      %s23 = sphi 0, %s30
      %s24 = sphi 0, %s22
      %s25 = sphi 0, %s23
      %s26 = sphi 0, %s24
      %s27 = sphi 0, %s25
      %s39 = sphi 0, %s41
      %s42 = sphi 0, %s39
      %s43 = sphi 0, %s42
      %s59 = sphi 0, %s43
      %s63 = sphi 0, %s63
      %s65 = sphi 0, %s63
      %s66 = sphi 0, %s65
      %s80 = sphi 0, %s66
      %s84 = sphi 0, %s84
      %s86 = sphi 0, %s84
      %s87 = sphi 0, %s86
      %s101 = sphi 0, %s87
      %s107 = sphi 0, %s109
      %s110 = sphi 0, %s107
      %s111 = sphi 0, %s110
      %s127 = sphi 0, %s111
    $region4: #{tpu_custom_call.1} parent=1 // loop_header_branch
      %18 = sbr.rel (%p16) target = $region8
    $region5: #{tpu_custom_call.1} parent=1 // loop_body
      %s20 = ssub.s32 %s15, 1
      %s21 = ssub.s32 %s15, 2
      %s28 = sadd.s32 1, %s23
      %p29 = scmp.ge.s32.totalorder %s28, 1
      %s30 = scalar_select %p29, 0, %s28
      %s31 = sadd.s32 1, %s22
      %s32 = scalar_select %p29, %s31, %s22
      %p33 = scmp.ge.s32.totalorder %s32, 2
      %s34 = scalar_select %p33, 0, %s32
      %s35 = ssub.s32 %s22, %s34
      %s36 = ssub.s32 %s23, %s30
      %s37 = sor.u32 %s35, %s36
      %p38 = scmp.eq.s32.totalorder %s37, 0
      %s40 = sadd.s32 %s39, 1
      %s41 = scalar_select %p38, %s39, %s40
      %p44 = pneg %p38
      %p45 = scmp.eq.s32.totalorder %s15, 1
      %p46 = por %p44, %p45
      %p47 = scmp.ne.s32.totalorder %s39, %s42
      %p48 = scmp.eq.s32.totalorder %s15, 0
      %p49 = por %p47, %p48
      %p50 = scmp.ne.s32.totalorder %s39, %s42
      %p51 = scmp.eq.s32.totalorder %s20, 1
      %p52 = por %p50, %p51
      %p53 = scmp.ne.s32.totalorder %s42, %s43
      %p54 = scmp.eq.s32.totalorder %s20, 0
      %p55 = por %p53, %p54
      %p56 = scmp.ne.s32.totalorder %s42, %s43
      %p57 = scmp.eq.s32.totalorder %s21, 1
      %p58 = por %p56, %p57
      %p60 = scmp.ne.s32.totalorder %s43, %s59
      %p61 = scmp.eq.s32.totalorder %s21, 0
      %p62 = por %p60, %p61
      %s64 = sadd.s32 %s63, 1
      %p67 = scmp.eq.s32.totalorder %s15, 1
      %p68 = scmp.ne.s32.totalorder %s63, %s65
      %p69 = scmp.eq.s32.totalorder %s15, 0
      %p70 = por %p68, %p69
      %p71 = scmp.ne.s32.totalorder %s63, %s65
      %p72 = scmp.eq.s32.totalorder %s20, 1
      %p73 = por %p71, %p72
      %p74 = scmp.ne.s32.totalorder %s65, %s66
      %p75 = scmp.eq.s32.totalorder %s20, 0
      %p76 = por %p74, %p75
      %p77 = scmp.ne.s32.totalorder %s65, %s66
      %p78 = scmp.eq.s32.totalorder %s21, 1
      %p79 = por %p77, %p78
      %p81 = scmp.ne.s32.totalorder %s66, %s80
      %p82 = scmp.eq.s32.totalorder %s21, 0
      %p83 = por %p81, %p82
      %s85 = sadd.s32 %s84, 1
      %p88 = scmp.eq.s32.totalorder %s15, 1
      %p89 = scmp.ne.s32.totalorder %s84, %s86
      %p90 = scmp.eq.s32.totalorder %s15, 0
      %p91 = por %p89, %p90
      %p92 = scmp.ne.s32.totalorder %s84, %s86
      %p93 = scmp.eq.s32.totalorder %s20, 1
      %p94 = por %p92, %p93
      %p95 = scmp.ne.s32.totalorder %s86, %s87
      %p96 = scmp.eq.s32.totalorder %s20, 0
      %p97 = por %p95, %p96
      %p98 = scmp.ne.s32.totalorder %s86, %s87
      %p99 = scmp.eq.s32.totalorder %s21, 1
      %p100 = por %p98, %p99
      %p102 = scmp.ne.s32.totalorder %s87, %s101
      %p103 = scmp.eq.s32.totalorder %s21, 0
      %p104 = por %p102, %p103
      %s105 = ssub.s32 %s22, %s34
      %p106 = scmp.eq.s32.totalorder %s105, 0
      %s108 = sadd.s32 %s107, 1
      %s109 = scalar_select %p106, %s107, %s108
      %p112 = pneg %p106
      %p113 = scmp.eq.s32.totalorder %s15, 1
      %p114 = por %p112, %p113
      %p115 = scmp.ne.s32.totalorder %s107, %s110
      %p116 = scmp.eq.s32.totalorder %s15, 0
      %p117 = por %p115, %p116
      %p118 = scmp.ne.s32.totalorder %s107, %s110
      %p119 = scmp.eq.s32.totalorder %s20, 1
      %p120 = por %p118, %p119
      %p121 = scmp.ne.s32.totalorder %s110, %s111
      %p122 = scmp.eq.s32.totalorder %s20, 0
      %p123 = por %p121, %p122
      %p124 = scmp.ne.s32.totalorder %s110, %s111
      %p125 = scmp.eq.s32.totalorder %s21, 1
      %p126 = por %p124, %p125
      %p128 = scmp.ne.s32.totalorder %s111, %s127
      %p129 = scmp.eq.s32.totalorder %s21, 0
      %p130 = por %p128, %p129
      %p131 = scmp.le.s32.totalorder 1, %s15
      %p132 = scmp.lt.s32.totalorder %s15, 3
      %p133 = pnand %p131, %p132
      %p134 = pneg %p133
      // Predicated region
      $region9: #{tpu_custom_call.1} parent=5 // pred_check
        _
      $region10: #{tpu_custom_call.1} parent=5 // pred_check_branch
        %136 = sbr.rel (%p133) target = $region12
      $region11: #{tpu_custom_call.1} parent=5 // pred_region
        %s137 = ssub.s32 %s15, 1
        // Predicated region
        $region13: #{tpu_custom_call.1} parent=11 // pred_check
          %p138 = pneg %p76
        $region14: #{tpu_custom_call.1} parent=11 // pred_check_branch
          %140 = sbr.rel (%p138) target = $region16
        $region15: #{tpu_custom_call.1} parent=11 // pred_region
          _
        $region16: #{tpu_custom_call.1} parent=11 // pred_fallthru
          _
        // Predicated region
        $region17: #{tpu_custom_call.1} parent=11 // pred_check
          %p141 = pneg %p97
        $region18: #{tpu_custom_call.1} parent=11 // pred_check_branch
          %143 = sbr.rel (%p141) target = $region20
        $region19: #{tpu_custom_call.1} parent=11 // pred_region
          _
        $region20: #{tpu_custom_call.1} parent=11 // pred_fallthru
          _
      $region12: #{tpu_custom_call.1} parent=5 // pred_fallthru
        _
      %p144 = scmp.lt.s32.totalorder %s15, 2
      // Predicated region
      $region21: #{tpu_custom_call.1} parent=5 // pred_check
        %p145 = pneg %p144
      $region22: #{tpu_custom_call.1} parent=5 // pred_check_branch
        %147 = sbr.rel (%p145) target = $region24
      $region23: #{tpu_custom_call.1} parent=5 // pred_region
        // Predicated region
        $region25: #{tpu_custom_call.1} parent=23 // pred_check
          %p148 = pneg %p49
        $region26: #{tpu_custom_call.1} parent=23 // pred_check_branch
          %150 = sbr.rel (%p148) target = $region28
        $region27: #{tpu_custom_call.1} parent=23 // pred_region
          %s151 = sand.u32 %s39, 1
          %s152 = scalar_lea.sflag [#allocation5], %s151
          %s153 = sand.u32 %s39, 1
          %s154 = smul.addr %s153, 64
          %s155 = scalar_lea.vmem [#allocation4], %s154
          %s156 = smul.u32 2, %s23
          %158 = vsyncadd %s152, 0
          %s159 = smul.addr %s22, 8
          %s160 = sadd.s32 %s156, %s159
          %s161 = smul.addr %s160, 8
          %s162 = scalar_lea.hbm %s0, %s161
          %s163 = sshll.u32 %s162, 4
          %s164 = int_to_ptr.hbm [resolvable:$true] %s163
          %s165 = sshll.u32 %s155, 4
          %s166 = int_to_ptr.vmem [resolvable:$true] %s165
          %171 = dma.hbm_to_vmem [thread:$0]  %s164, 1024, %s166, %s152, 256, 256, 16
        $region28: #{tpu_custom_call.1} parent=23 // pred_fallthru
          _
      $region24: #{tpu_custom_call.1} parent=5 // pred_fallthru
        _
      %p172 = scmp.le.s32.totalorder 1, %s15
      %p173 = scmp.lt.s32.totalorder %s15, 3
      %p174 = pnand %p172, %p173
      %p175 = pneg %p174
      // Predicated region
      $region29: #{tpu_custom_call.1} parent=5 // pred_check
        _
      $region30: #{tpu_custom_call.1} parent=5 // pred_check_branch
        %177 = sbr.rel (%p174) target = $region32
      $region31: #{tpu_custom_call.1} parent=5 // pred_region
        %s178 = ssub.s32 %s15, 1
        %s179 = sand.u32 %s42, 1
        %s180 = scalar_lea.sflag [#allocation5], %s179
        %s181 = sand.u32 %s42, 1
        %s182 = smul.addr %s181, 64
        %s183 = scalar_lea.vmem [#allocation4], %s182
        // Predicated region
        $region33: #{tpu_custom_call.1} parent=31 // pred_check
          %p184 = pneg %p55
        $region34: #{tpu_custom_call.1} parent=31 // pred_check_branch
          %186 = sbr.rel (%p184) target = $region36
        $region35: #{tpu_custom_call.1} parent=31 // pred_region
          %188 = dma.done %s180, 1024
        $region36: #{tpu_custom_call.1} parent=31 // pred_fallthru
          _
        %s189 = sand.u32 %s42, 1
        %s190 = scalar_lea.sflag [#allocation5], %s189
        %s191 = sand.u32 %s42, 1
        %s192 = smul.addr %s191, 64
        %s193 = scalar_lea.vmem [#allocation4], %s192
        %p194 = pneg %p55
        %p195 = pneg %p52
        %p196 = pneg %p76
        %p197 = pneg %p73
        %p198 = pneg %p97
        %p199 = pneg %p94
        %p200 = pneg %p123
        %p201 = pneg %p120
        %s202 = sand.u32 %s110, 1
        %s203 = scalar_lea.sflag [#allocation6], %s202
        %s204 = sand.u32 %s110, 1
        %s205 = scalar_lea.vmem [#allocation7], %s204
        %s206 = smul.u32 2, %s25
        %p207 = scmp.eq.s32.totalorder %s25, 0
        // Predicated region
        $region37: #{tpu_custom_call.1} parent=31 // pred_check
          %p208 = pneg %p207
        $region38: #{tpu_custom_call.1} parent=31 // pred_check_branch
          %210 = sbr.rel (%p208) target = $region40
        $region39: #{tpu_custom_call.1} parent=31 // pred_region
          %vm211 = vcmask 253952
          %212 = vst.msk [vmem:[#allocation2] sm:$0x1] %vm211, 0.0
          %213 = vst.msk [vmem:[#allocation3] sm:$0x1] %vm211, -inf
        $region40: #{tpu_custom_call.1} parent=31 // pred_fallthru
          _
        %v214 = vld [vmem:[%s183] sm:$0xff]
        %v215 = vld [vmem:[%s183 + $0x8] sm:$0xff]
        %v216 = vld [vmem:[%s183 + $0x10] sm:$0xff]
        %v217 = vld [vmem:[%s183 + $0x18] sm:$0xff]
        %v218 = vld [vmem:[%s183 + $0x20] sm:$0xff]
        %v219 = vld [vmem:[%s183 + $0x28] sm:$0xff]
        %v220 = vld [vmem:[%s183 + $0x30] sm:$0xff]
        %v221 = vld [vmem:[%s183 + $0x38] sm:$0xff]
        %v222 = vld [vmem:[#allocation2] sm:$0x1]
        %v223 = vadd.f32 %v214, %v215
        %224 = vadd.xlane.f32.xlu0 %v223
        %v225 = vpop.xlane.xlu0 %224
        %v226 = vadd.f32 %v216, %v217
        %227 = vadd.xlane.f32.xlu0 %v226
        %v228 = vpop.xlane.xlu0 %227
        %v229 = vadd.f32 %v218, %v219
        %230 = vadd.xlane.f32.xlu0 %v229
        %v231 = vpop.xlane.xlu0 %230
        %v232 = vadd.f32 %v220, %v221
        %233 = vadd.xlane.f32.xlu0 %v232
        %v234 = vpop.xlane.xlu0 %233
        %v239 = vperm.slane %v225, 0
        %v240 = vperm.slane %v225, 1
        %v241 = vperm.slane %v225, 2
        %v242 = vperm.slane %v225, 3
        %v243 = vperm.slane %v225, 4
        %v244 = vperm.slane %v225, 5
        %v245 = vperm.slane %v225, 6
        %v246 = vperm.slane %v225, 7
        %v247 = vperm.slane %v228, 0
        %v248 = vperm.slane %v228, 1
        %v249 = vperm.slane %v228, 2
        %v250 = vperm.slane %v228, 3
        %v251 = vperm.slane %v228, 4
        %v252 = vperm.slane %v228, 5
        %v253 = vperm.slane %v228, 6
        %v254 = vperm.slane %v228, 7
        %v255 = vperm.slane %v231, 0
        %v256 = vperm.slane %v231, 1
        %v257 = vperm.slane %v231, 2
        %v258 = vperm.slane %v231, 3
        %v259 = vperm.slane %v231, 4
        %v260 = vperm.slane %v231, 5
        %v261 = vperm.slane %v231, 6
        %v262 = vperm.slane %v231, 7
        %v263 = vperm.slane %v234, 0
        %v264 = vperm.slane %v234, 1
        %v265 = vperm.slane %v234, 2
        %v266 = vperm.slane %v234, 3
        %v267 = vperm.slane %v234, 4
        %v268 = vperm.slane %v234, 5
        %v269 = vperm.slane %v234, 6
        %v270 = vperm.slane %v234, 7
        %271 = vst [vmem:[#allocation1] ss:$9 sm:$0xff] %v239
        %s272 = scalar_lea.vmem [#allocation1], 1
        %273 = vst [vmem:[%s272] ss:$9 sm:$0xff] %v240
        %s274 = scalar_lea.vmem [#allocation1], 2
        %275 = vst [vmem:[%s274] ss:$9 sm:$0xff] %v241
        %s276 = scalar_lea.vmem [#allocation1], 3
        %277 = vst [vmem:[%s276] ss:$9 sm:$0xff] %v242
        %s278 = scalar_lea.vmem [#allocation1], 4
        %279 = vst [vmem:[%s278] ss:$9 sm:$0xff] %v243
        %s280 = scalar_lea.vmem [#allocation1], 5
        %281 = vst [vmem:[%s280] ss:$9 sm:$0xff] %v244
        %s282 = scalar_lea.vmem [#allocation1], 6
        %283 = vst [vmem:[%s282] ss:$9 sm:$0xff] %v245
        %s284 = scalar_lea.vmem [#allocation1], 7
        %285 = vst [vmem:[%s284] ss:$9 sm:$0xff] %v246
        %v286 = vld [vmem:[#allocation1] sm:$0xff]
        %287 = vst [vmem:[#allocation1] ss:$9 sm:$0xff] %v247
        %288 = vst [vmem:[%s272] ss:$9 sm:$0xff] %v248
        %289 = vst [vmem:[%s274] ss:$9 sm:$0xff] %v249
        %290 = vst [vmem:[%s276] ss:$9 sm:$0xff] %v250
        %291 = vst [vmem:[%s278] ss:$9 sm:$0xff] %v251
        %292 = vst [vmem:[%s280] ss:$9 sm:$0xff] %v252
        %293 = vst [vmem:[%s282] ss:$9 sm:$0xff] %v253
        %294 = vst [vmem:[%s284] ss:$9 sm:$0xff] %v254
        %v295 = vld [vmem:[#allocation1] sm:$0xff]
        %296 = vst [vmem:[#allocation1] ss:$9 sm:$0xff] %v255
        %297 = vst [vmem:[%s272] ss:$9 sm:$0xff] %v256
        %298 = vst [vmem:[%s274] ss:$9 sm:$0xff] %v257
        %299 = vst [vmem:[%s276] ss:$9 sm:$0xff] %v258
        %300 = vst [vmem:[%s278] ss:$9 sm:$0xff] %v259
        %301 = vst [vmem:[%s280] ss:$9 sm:$0xff] %v260
        %302 = vst [vmem:[%s282] ss:$9 sm:$0xff] %v261
        %303 = vst [vmem:[%s284] ss:$9 sm:$0xff] %v262
        %v304 = vld [vmem:[#allocation1] sm:$0xff]
        %305 = vst [vmem:[#allocation1] ss:$9 sm:$0xff] %v263
        %306 = vst [vmem:[%s272] ss:$9 sm:$0xff] %v264
        %307 = vst [vmem:[%s274] ss:$9 sm:$0xff] %v265
        %308 = vst [vmem:[%s276] ss:$9 sm:$0xff] %v266
        %309 = vst [vmem:[%s278] ss:$9 sm:$0xff] %v267
        %310 = vst [vmem:[%s280] ss:$9 sm:$0xff] %v268
        %311 = vst [vmem:[%s282] ss:$9 sm:$0xff] %v269
        %312 = vst [vmem:[%s284] ss:$9 sm:$0xff] %v270
        %v313 = vld [vmem:[#allocation1] sm:$0xff]
        %314 = vset.pattern.permute.xlu0 0
        %315 = vperm.xlu0 %314, %v286
        %v316 = vpop.permute.xlu0 %315
        %317 = vset.pattern.permute.xlu0 0
        %318 = vperm.xlu0 %317, %v295
        %v319 = vpop.permute.xlu0 %318
        %320 = vset.pattern.permute.xlu0 0
        %321 = vperm.xlu0 %320, %v304
        %v322 = vpop.permute.xlu0 %321
        %323 = vset.pattern.permute.xlu0 0
        %324 = vperm.xlu0 %323, %v313
        %v325 = vpop.permute.xlu0 %324
        %v326 = vlaneseq
        %v327 = vand.u32 %v326, 127
        %v328 = vperm.slane %v316, %v327
        %v329 = vadd.s32 %v327, 4294967288
        %v330 = vperm.slane %v319, %v329
        %vm331 = vcmask 130112
        %v332 = vsel %vm331, %v330, %v328
        %v333 = vadd.s32 %v327, 4294967280
        %v334 = vperm.slane %v322, %v333
        %vm335 = vcmask 195712
        %v336 = vsel %vm335, %v334, %v332
        %v337 = vadd.s32 %v327, 4294967272
        %v338 = vperm.slane %v325, %v337
        %vm339 = vcmask 261312
        %v340 = vsel %vm339, %v338, %v336
        %v342 = vadd.f32 %v222, %v340
        %vm343 = vcmask 253952
        %344 = vst.msk [vmem:[#allocation2] sm:$0x1] %vm343, %v342
        %v345 = vld [vmem:[#allocation3] sm:$0x1]
        %v346 = vmax.f32 %v214, %v215
        %347 = vmax.xlane.f32.xlu0 %v346
        %v348 = vpop.xlane.xlu0 %347
        %v349 = vmax.f32 %v216, %v217
        %350 = vmax.xlane.f32.xlu0 %v349
        %v351 = vpop.xlane.xlu0 %350
        %v352 = vmax.f32 %v218, %v219
        %353 = vmax.xlane.f32.xlu0 %v352
        %v354 = vpop.xlane.xlu0 %353
        %v355 = vmax.f32 %v220, %v221
        %356 = vmax.xlane.f32.xlu0 %v355
        %v357 = vpop.xlane.xlu0 %356
        %v362 = vperm.slane %v348, 0
        %v363 = vperm.slane %v348, 1
        %v364 = vperm.slane %v348, 2
        %v365 = vperm.slane %v348, 3
        %v366 = vperm.slane %v348, 4
        %v367 = vperm.slane %v348, 5
        %v368 = vperm.slane %v348, 6
        %v369 = vperm.slane %v348, 7
        %v370 = vperm.slane %v351, 0
        %v371 = vperm.slane %v351, 1
        %v372 = vperm.slane %v351, 2
        %v373 = vperm.slane %v351, 3
        %v374 = vperm.slane %v351, 4
        %v375 = vperm.slane %v351, 5
        %v376 = vperm.slane %v351, 6
        %v377 = vperm.slane %v351, 7
        %v378 = vperm.slane %v354, 0
        %v379 = vperm.slane %v354, 1
        %v380 = vperm.slane %v354, 2
        %v381 = vperm.slane %v354, 3
        %v382 = vperm.slane %v354, 4
        %v383 = vperm.slane %v354, 5
        %v384 = vperm.slane %v354, 6
        %v385 = vperm.slane %v354, 7
        %v386 = vperm.slane %v357, 0
        %v387 = vperm.slane %v357, 1
        %v388 = vperm.slane %v357, 2
        %v389 = vperm.slane %v357, 3
        %v390 = vperm.slane %v357, 4
        %v391 = vperm.slane %v357, 5
        %v392 = vperm.slane %v357, 6
        %v393 = vperm.slane %v357, 7
        %394 = vst [vmem:[#allocation1] ss:$9 sm:$0xff] %v362
        %s395 = scalar_lea.vmem [#allocation1], 1
        %396 = vst [vmem:[%s395] ss:$9 sm:$0xff] %v363
        %s397 = scalar_lea.vmem [#allocation1], 2
        %398 = vst [vmem:[%s397] ss:$9 sm:$0xff] %v364
        %s399 = scalar_lea.vmem [#allocation1], 3
        %400 = vst [vmem:[%s399] ss:$9 sm:$0xff] %v365
        %s401 = scalar_lea.vmem [#allocation1], 4
        %402 = vst [vmem:[%s401] ss:$9 sm:$0xff] %v366
        %s403 = scalar_lea.vmem [#allocation1], 5
        %404 = vst [vmem:[%s403] ss:$9 sm:$0xff] %v367
        %s405 = scalar_lea.vmem [#allocation1], 6
        %406 = vst [vmem:[%s405] ss:$9 sm:$0xff] %v368
        %s407 = scalar_lea.vmem [#allocation1], 7
        %408 = vst [vmem:[%s407] ss:$9 sm:$0xff] %v369
        %v409 = vld [vmem:[#allocation1] sm:$0xff]
        %410 = vst [vmem:[#allocation1] ss:$9 sm:$0xff] %v370
        %411 = vst [vmem:[%s395] ss:$9 sm:$0xff] %v371
        %412 = vst [vmem:[%s397] ss:$9 sm:$0xff] %v372
        %413 = vst [vmem:[%s399] ss:$9 sm:$0xff] %v373
        %414 = vst [vmem:[%s401] ss:$9 sm:$0xff] %v374
        %415 = vst [vmem:[%s403] ss:$9 sm:$0xff] %v375
        %416 = vst [vmem:[%s405] ss:$9 sm:$0xff] %v376
        %417 = vst [vmem:[%s407] ss:$9 sm:$0xff] %v377
        %v418 = vld [vmem:[#allocation1] sm:$0xff]
        %419 = vst [vmem:[#allocation1] ss:$9 sm:$0xff] %v378
        %420 = vst [vmem:[%s395] ss:$9 sm:$0xff] %v379
        %421 = vst [vmem:[%s397] ss:$9 sm:$0xff] %v380
        %422 = vst [vmem:[%s399] ss:$9 sm:$0xff] %v381
        %423 = vst [vmem:[%s401] ss:$9 sm:$0xff] %v382
        %424 = vst [vmem:[%s403] ss:$9 sm:$0xff] %v383
        %425 = vst [vmem:[%s405] ss:$9 sm:$0xff] %v384
        %426 = vst [vmem:[%s407] ss:$9 sm:$0xff] %v385
        %v427 = vld [vmem:[#allocation1] sm:$0xff]
        %428 = vst [vmem:[#allocation1] ss:$9 sm:$0xff] %v386
        %429 = vst [vmem:[%s395] ss:$9 sm:$0xff] %v387
        %430 = vst [vmem:[%s397] ss:$9 sm:$0xff] %v388
        %431 = vst [vmem:[%s399] ss:$9 sm:$0xff] %v389
        %432 = vst [vmem:[%s401] ss:$9 sm:$0xff] %v390
        %433 = vst [vmem:[%s403] ss:$9 sm:$0xff] %v391
        %434 = vst [vmem:[%s405] ss:$9 sm:$0xff] %v392
        %435 = vst [vmem:[%s407] ss:$9 sm:$0xff] %v393
        %v436 = vld [vmem:[#allocation1] sm:$0xff]
        %437 = vset.pattern.permute.xlu0 0
        %438 = vperm.xlu0 %437, %v409
        %v439 = vpop.permute.xlu0 %438
        %440 = vset.pattern.permute.xlu0 0
        %441 = vperm.xlu0 %440, %v418
        %v442 = vpop.permute.xlu0 %441
        %443 = vset.pattern.permute.xlu0 0
        %444 = vperm.xlu0 %443, %v427
        %v445 = vpop.permute.xlu0 %444
        %446 = vset.pattern.permute.xlu0 0
        %447 = vperm.xlu0 %446, %v436
        %v448 = vpop.permute.xlu0 %447
        %v449 = vperm.slane %v439, %v327
        %v450 = vperm.slane %v442, %v329
        %v451 = vsel %vm331, %v450, %v449
        %v452 = vperm.slane %v445, %v333
        %v453 = vsel %vm335, %v452, %v451
        %v454 = vperm.slane %v448, %v337
        %v455 = vsel %vm339, %v454, %v453
        %v457 = vmax.f32 %v345, %v455
        %458 = vst.msk [vmem:[#allocation3] sm:$0x1] %vm343, %v457
        // Predicated region
        $region41: #{tpu_custom_call.1} parent=31 // pred_check
          %p459 = pneg %p207
        $region42: #{tpu_custom_call.1} parent=31 // pred_check_branch
          %461 = sbr.rel (%p459) target = $region44
        $region43: #{tpu_custom_call.1} parent=31 // pred_region
          %v462 = vld [vmem:[#allocation2] sm:$0x1]
          %v463 = vmul.f32 %v462, 0.00390625
          %v464 = vld [vmem:[#allocation3] sm:$0x1]
          %v466 = vperm.slane %v464, 0
          %vm468 = vcmask 1040384
          %v469 = vsel %vm468, %v463, %v466
          %v470 = vld [vmem:[%s1] sm:$0xff]
          %v471 = vld [vmem:[%s1 + $0x8] sm:$0xff]
          %v472 = vld [vmem:[%s1 + $0x10] sm:$0xff]
          %v473 = vld [vmem:[%s1 + $0x18] sm:$0xff]
          %vm474 = vcmask 261120
          %v476 = vsel %vm474, %v469, 0
          %478 = vmatpush.msra.mxu0 0.0
          %479 = vmatpush.msra.mxu0 0.0
          %480 = vmatpush.msra.mxu0 0.0
          %481 = vmatpush.msra.mxu0 0.0
          %482 = vmatpush.msra.mxu0 0.0
          %483 = vmatpush.msra.mxu0 0.0
          %484 = vmatpush.msra.mxu0 0.0
          %485 = vmatpush.msra.mxu0 0.0
          %486 = vmatpush.msra.mxu0 0.0
          %487 = vmatpush.msra.mxu0 0.0
          %488 = vmatpush.msra.mxu0 0.0
          %489 = vmatpush.msra.mxu0 0.0
          %490 = vmatpush.msra.mxu0 %v473
          %491 = vmatpush.msra.mxu0 %v472
          %492 = vmatpush.msra.mxu0 %v471
          %493 = vmatpush.msra.mxu0 %v470
          %494 = vmatmul.f32.gmra.mxu0 %v476
          %v495 = vpop.f32.mrf.mxu0
          %v496 = vadd.f32 0.0, %v495
          %497 = vdwg.mxu0
          %v498 = vmax.f32 %v496, 0.0
          %v499 = vld [vmem:[%s2] sm:$0x3]
          %vm500 = vcmask 15360
          %v502 = vsel %vm500, %v498, 0
          %vm504 = vcmask 1041408
          %v506 = vsel %vm504, %v499, 0
          %508 = vmatpush.msra.mxu0 0.0
          %509 = vmatpush.msra.mxu0 0.0
          %510 = vmatpush.msra.mxu0 0.0
          %511 = vmatpush.msra.mxu0 0.0
          %512 = vmatpush.msra.mxu0 0.0
          %513 = vmatpush.msra.mxu0 0.0
          %514 = vmatpush.msra.mxu0 0.0
          %515 = vmatpush.msra.mxu0 0.0
          %516 = vmatpush.msra.mxu0 0.0
          %517 = vmatpush.msra.mxu0 0.0
          %518 = vmatpush.msra.mxu0 0.0
          %519 = vmatpush.msra.mxu0 0.0
          %520 = vmatpush.msra.mxu0 0.0
          %521 = vmatpush.msra.mxu0 0.0
          %522 = vmatpush.msra.mxu0 0.0
          %523 = vmatpush.msra.mxu0 %v506
          %524 = vmatmul.f32.gmra.mxu0 %v502
          %v525 = vpop.f32.mrf.mxu0
          %v526 = vadd.f32 0.0, %v525
          %527 = vdwg.mxu0
          %v529 = vrot.slane %v526, 1
          %v531 = vadd.f32 %v526, %v529
          %v532 = vxor.u32 %v531, 2147483648
          %v533 = vmul.f32 %v532, 1.442695
          %v534 = vpow.pop %v533
          %v535 = vadd.f32 %v534, 1.0
          %v536 = vrcp.pop %v535
          %v537 = vmul.f32 %v535, %v536
          %v538 = vsub.f32 1.0, %v537
          %v539 = vmul.f32 %v536, %v538
          %v540 = vadd.f32 %v536, %v539
          %vm541 = vweird.f32 %v535
          %vm542 = vweird.f32 %v536
          %vm543 = vmor %vm541, %vm542
          %v544 = vsel %vm543, %v536, %v540
          %v545 = vand.u32 2147483647, %v535
          %vm546 = vcmp.eq.f32.partialorder %v545, 8.507059e+37
          %v547 = vand.u32 %v535, 2147483648
          %v548 = vor.u32 1.1754944e-38, %v547
          %v549 = vsel %vm546, %v548, %v544
          %v550 = vmul.f32 1.0, %v549
          %551 = vst.msk [vmem:[%s205] sm:$0x1] %vm343, %v550
        $region44: #{tpu_custom_call.1} parent=31 // pred_fallthru
          _
        %s552 = sand.u32 %s110, 1
        %s553 = scalar_lea.sflag [#allocation6], %s552
        %s554 = sand.u32 %s110, 1
        %s555 = scalar_lea.vmem [#allocation7], %s554
        // Predicated region
        $region45: #{tpu_custom_call.1} parent=31 // pred_check
          %p556 = pneg %p120
        $region46: #{tpu_custom_call.1} parent=31 // pred_check_branch
          %558 = sbr.rel (%p556) target = $region48
        $region47: #{tpu_custom_call.1} parent=31 // pred_region
          %560 = vsyncadd %s553, 0
          %s561 = scalar_lea.hbm %s3, %s24
          %s563 = sshll.u32 %s555, 4
          %s564 = int_to_ptr.vmem [resolvable:$true] %s563
          %s565 = sshll.u32 %s561, 4
          %s566 = int_to_ptr.hbm [resolvable:$true] %s565
          %568 = dma.vmem_to_hbm [thread:$0]  %s564, 16, %s566, %s553
        $region48: #{tpu_custom_call.1} parent=31 // pred_fallthru
          _
      $region32: #{tpu_custom_call.1} parent=5 // pred_fallthru
        _
      %p569 = scmp.le.s32.totalorder 2, %s15
      // Predicated region
      $region49: #{tpu_custom_call.1} parent=5 // pred_check
        %p570 = pneg %p569
      $region50: #{tpu_custom_call.1} parent=5 // pred_check_branch
        %572 = sbr.rel (%p570) target = $region52
      $region51: #{tpu_custom_call.1} parent=5 // pred_region
        %s573 = ssub.s32 %s15, 2
        // Predicated region
        $region53: #{tpu_custom_call.1} parent=51 // pred_check
          %p574 = pneg %p126
        $region54: #{tpu_custom_call.1} parent=51 // pred_check_branch
          %576 = sbr.rel (%p574) target = $region56
        $region55: #{tpu_custom_call.1} parent=51 // pred_region
          %s577 = sand.u32 %s111, 1
          %s578 = scalar_lea.sflag [#allocation6], %s577
          %s579 = sand.u32 %s111, 1
          %s580 = scalar_lea.vmem [#allocation7], %s579
          %582 = dma.done %s578, 16
        $region56: #{tpu_custom_call.1} parent=51 // pred_fallthru
          _
      $region52: #{tpu_custom_call.1} parent=5 // pred_fallthru
        _
    $region6: #{tpu_custom_call.1} parent=1 // loop_footer
      %s19 = sadd.s32 1, %s15
    $region7: #{tpu_custom_call.1} parent=1 // loop_footer_branch
      %14 = sbr.rel target = $region3
    $region8: #{tpu_custom_call.1} parent=1 // loop_exit
      _
    %583 = vsyncpa [#allocation5], 1
    %s584 = scalar_lea.sflag [#allocation5], 1
    %585 = vsyncpa %s584, 1
    %586 = vsyncpa [#allocation6], 1
    %s587 = scalar_lea.sflag [#allocation6], 1
    %588 = vsyncpa %s587, 1

</llo_original>
